<compile_context>
chip_gen: v6e
topology: v6e:2x2x1
jax: 0.10.0
libtpu: 0.0.40
codegen_flags: <defaults>
</compile_context>

<pallas_src>
import math

import jax
import jax.numpy as jnp
from jax import lax
from jax.experimental import pallas as pl
from jax.experimental.pallas import tpu as pltpu


def _round_up(x: int, m: int) -> int:
    return ((x + m - 1) // m) * m


# dimension_numbers for "A @ B.T" (contract the last dim of both operands) --
# the MXU handles the transposed-RHS feed natively, no relayout materialized.
_TRANS_B = (((1,), (1,)), ((), ()))


def _fe_critic_kernel(enc_ref, obs_ref, act_ref,
                      w1e_ref, w1o_ref, w1a_ref,
                      w2_ref, w3l_ref, w3e_ref, w4_ref,
                      b1_ref, b2_ref, b3_ref, b4_ref,
                      out_ref):
    f32 = jnp.float32
    enc = enc_ref[...]
    obs = obs_ref[...]
    act = act_ref[...]

    # preprocess layer 1: cat([obs, act, enc]) @ W1 as an exact 3-way K split
    # (no concat materialized anywhere). Accumulation + bias + ReLU in f32.
    a1 = (jnp.dot(obs, w1o_ref[...], preferred_element_type=f32)
          + jnp.dot(act, w1a_ref[...], preferred_element_type=f32)
          + jnp.dot(enc, w1e_ref[...], preferred_element_type=f32)
          + b1_ref[...])
    a1 = jnp.maximum(a1, 0.0)

    # preprocess output layer -> logits
    logits = jnp.dot(a1.astype(w2_ref.dtype), w2_ref[...],
                     preferred_element_type=f32) + b2_ref[...]

    # last MLP hidden: cat([logits, enc]) @ W3 == logits @ W3l + enc @ W3e
    a2 = (jnp.dot(logits.astype(w3l_ref.dtype), w3l_ref[...],
                  preferred_element_type=f32)
          + jnp.dot(enc, w3e_ref[...], preferred_element_type=f32)
          + b3_ref[...])
    a2 = jnp.maximum(a2, 0.0)                                  # (TB, H2) f32

    # final linear -> Q(s, a), computed directly in the lane-dense (1, TB)
    # output layout: W4 is stored as an (8, H2) slab with only row 0 real;
    # contracting H2 against the rows of a2 gives (8, TB); row 0 is q.
    q8 = lax.dot_general(w4_ref[...], a2, _TRANS_B,
                         preferred_element_type=f32)           # (8, TB)
    out_ref[...] = (q8[0:1, :] + b4_ref[...]).astype(out_ref.dtype)


def pack_params(params, dtype=jnp.float32):
    """One-time repacking of raw per-layer params into kernel-friendly arrays.

    `dtype` is the storage dtype for weight matrices / encodings / activation
    tiles (float32 or bfloat16). Biases, W4 and all in-kernel accumulation and
    elementwise math stay float32.
    """
    h2 = params["w3l"].shape[1]
    w4 = jnp.zeros((8, h2), jnp.float32).at[0, :].set(
        params["w4"].reshape(-1).astype(jnp.float32))
    return {
        "encodings": params["encodings"].astype(dtype),
        "w1e": params["w1e"].astype(dtype),
        "w1o": params["w1o"].astype(dtype),
        "w1a": params["w1a"].astype(dtype),
        "w2": params["w2"].astype(dtype),
        "w3l": params["w3l"].astype(dtype),
        "w3e": params["w3e"].astype(dtype),
        "w4": w4,                                            # (8, H2) f32, row 0 real
        "b1": params["b1"].reshape(1, -1).astype(jnp.float32),
        "b2": params["b2"].reshape(1, -1).astype(jnp.float32),
        "b3": params["b3"].reshape(1, -1).astype(jnp.float32),
        "b4": params["b4"].reshape(1, 1).astype(jnp.float32),
    }


def function_encoder_critic(obs, act, env_id, packed, *, block_batch=1024):
    """Flatten / gather glue in JAX; the whole 4-layer hot path in one kernel."""
    assert block_batch % 128 == 0, "block_batch must be a multiple of 128"
    B = obs.shape[0]
    store_dt = packed["w1o"].dtype

    obs_flat = obs.reshape(B, -1).astype(store_dt)            # (B, O)
    act_flat = act.reshape(B, -1).astype(store_dt)            # (B, A)
    enc = packed["encodings"][env_id]                         # (B, E) gather (glue)

    e_dim, o_dim, a_dim = enc.shape[1], obs_flat.shape[1], act_flat.shape[1]
    h1 = packed["w1o"].shape[1]
    p_out = packed["w2"].shape[1]
    h2 = packed["w3l"].shape[1]

    # Batch-tile selection. No jnp.pad: Pallas clips the partial last block;
    # its garbage rows are row-independent and sliced away with [:B] below.
    if B <= 256:
        tb = _round_up(max(B, 1), 8)                # single tile, tiny batch
    else:
        # >= 2 grid steps so both v7x TensorCores get work; 128-aligned tile.
        tb = min(block_batch, _round_up(-(-B // 2), 128))
    num_tiles = -(-B // tb)

    def batch_spec(d):
        return pl.BlockSpec((tb, d), lambda i: (i, 0))

    def param_spec(arr):
        # Resident block: constant index map -> DMA'd once, reused every step.
        return pl.BlockSpec(arr.shape, lambda i: (0, 0))

    itemsize = jnp.dtype(store_dt).itemsize
    flops = 2 * B * ((e_dim + o_dim + a_dim) * h1 + h1 * p_out
                     + (p_out + e_dim) * h2 + h2)
    param_bytes = sum(
        int(packed[k].size) * jnp.dtype(packed[k].dtype).itemsize
        for k in ("w1e", "w1o", "w1a", "w2", "w3l", "w3e", "w4",
                  "b1", "b2", "b3", "b4"))
    bytes_accessed = int(B * (e_dim + o_dim + a_dim) * itemsize + B * 4
                         + param_bytes)

    out = pl.pallas_call(
        _fe_critic_kernel,
        out_shape=jax.ShapeDtypeStruct((num_tiles, 1, tb), jnp.float32),
        grid_spec=pltpu.PrefetchScalarGridSpec(
            num_scalar_prefetch=0,
            grid=(num_tiles,),
            in_specs=[
                batch_spec(e_dim),            # enc
                batch_spec(o_dim),            # obs
                batch_spec(a_dim),            # act
                param_spec(packed["w1e"]),
                param_spec(packed["w1o"]),
                param_spec(packed["w1a"]),
                param_spec(packed["w2"]),
                param_spec(packed["w3l"]),
                param_spec(packed["w3e"]),
                param_spec(packed["w4"]),
                param_spec(packed["b1"]),
                param_spec(packed["b2"]),
                param_spec(packed["b3"]),
                param_spec(packed["b4"]),
            ],
            # One lane-dense (1, TB) row per grid step; leading dim squeezed.
            out_specs=pl.BlockSpec((None, 1, tb), lambda i: (i, 0, 0)),
        ),
        compiler_params=pltpu.CompilerParams(
            dimension_semantics=("parallel",),
            vmem_limit_bytes=32 * 1024 * 1024,
        ),
        cost_estimate=pl.CostEstimate(
            flops=int(flops), transcendentals=0, bytes_accessed=bytes_accessed),
    )(enc, obs_flat, act_flat,
      packed["w1e"], packed["w1o"], packed["w1a"],
      packed["w2"], packed["w3l"], packed["w3e"], packed["w4"],
      packed["b1"], packed["b2"], packed["b3"], packed["b4"])

    # (num_tiles, 1, TB) -> (B, 1); trailing garbage (partial block) dropped.
    return out.reshape(-1)[:B, None]


def reference_forward(obs, act, env_id, params):
    """Pure-JAX reference mirroring the PyTorch forward (raw f32 params)."""
    hp = lax.Precision.HIGHEST
    B = obs.shape[0]
    obs_flat = obs.reshape(B, -1).astype(jnp.float32)
    act_flat = act.reshape(B, -1).astype(jnp.float32)
    enc = params["encodings"][env_id]
    x = jnp.concatenate([obs_flat, act_flat, enc], axis=1)
    w1 = jnp.concatenate([params["w1o"], params["w1a"], params["w1e"]], axis=0)
    h1 = jnp.maximum(jnp.dot(x, w1, precision=hp) + params["b1"], 0.0)
    logits = jnp.dot(h1, params["w2"], precision=hp) + params["b2"]
    z = jnp.concatenate([logits, enc], axis=1)
    w3 = jnp.concatenate([params["w3l"], params["w3e"]], axis=0)
    h2 = jnp.maximum(jnp.dot(z, w3, precision=hp) + params["b3"], 0.0)
    return jnp.dot(h2, params["w4"], precision=hp) + params["b4"]


def make_params(key, obs_dim, act_dim, embed_size, n_envs, h1, p_out, h2):
    ks = jax.random.split(key, 12)
    s = 0.1
    return {
        "encodings": jax.random.normal(ks[0], (n_envs, embed_size), jnp.float32),
        "w1o": s * jax.random.normal(ks[1], (obs_dim, h1), jnp.float32),
        "w1a": s * jax.random.normal(ks[2], (act_dim, h1), jnp.float32),
        "w1e": s * jax.random.normal(ks[3], (embed_size, h1), jnp.float32),
        "b1": s * jax.random.normal(ks[4], (1, h1), jnp.float32),
        "w2": s * jax.random.normal(ks[5], (h1, p_out), jnp.float32),
        "b2": s * jax.random.normal(ks[6], (1, p_out), jnp.float32),
        "w3l": s * jax.random.normal(ks[7], (p_out, h2), jnp.float32),
        "w3e": s * jax.random.normal(ks[8], (embed_size, h2), jnp.float32),
        "b3": s * jax.random.normal(ks[9], (1, h2), jnp.float32),
        "w4": s * jax.random.normal(ks[10], (h2, 1), jnp.float32),
        "b4": s * jax.random.normal(ks[11], (1, 1), jnp.float32),
    }


if __name__ == "__main__":
    key = jax.random.PRNGKey(0)
    k_obs, k_act, k_par, k_obs2, k_act2 = jax.random.split(key, 5)

    # Small shapes consistent with the forward:
    B = 8                   # batch
    obs_shape = (4, 2, 2)   # per-sample obs, flattened to 16 features
    act_dim = 4
    embed_size = 8
    n_envs = 4
    H1, P_OUT, H2 = 32, 32, 32  # preprocess hidden / preprocess out / last hidden

    obs = jax.random.normal(k_obs, (B,) + obs_shape, jnp.float32)
    act = jax.random.normal(k_act, (B, act_dim), jnp.float32)
    env_id = jnp.array([0, 1, 2, 3, 0, 1, 2, 3], dtype=jnp.int32)

    obs_dim = math.prod(obs_shape)
    params = make_params(k_par, obs_dim, act_dim, embed_size, n_envs, H1, P_OUT, H2)
    packed = pack_params(params)       # one-time repacking (outside hot path)

    # 1) single-tile path (tiny batch)
    q = function_encoder_critic(obs, act, env_id, packed)
    q = jax.block_until_ready(q)
    q_ref = reference_forward(obs, act, env_id, params)
    assert q.shape == (B, 1)
    assert jnp.allclose(q, q_ref, atol=5e-3, rtol=5e-3), \
        "Pallas output mismatch (small batch)"

    # 2) multi-tile grid + clipped partial last block (no padding copy)
    B2 = 300
    obs2 = jax.random.normal(k_obs2, (B2,) + obs_shape, jnp.float32)
    act2 = jax.random.normal(k_act2, (B2, act_dim), jnp.float32)
    env_id2 = (jnp.arange(B2, dtype=jnp.int32) % n_envs)
    q2 = function_encoder_critic(obs2, act2, env_id2, packed, block_batch=1024)
    q2 = jax.block_until_ready(q2)
    q2_ref = reference_forward(obs2, act2, env_id2, params)
    assert q2.shape == (B2, 1)
    assert jnp.allclose(q2, q2_ref, atol=5e-3, rtol=5e-3), \
        "Pallas output mismatch (tiled batch)"

    # 3) bf16 weight/activation storage (halves HBM bytes), f32 accumulation
    packed_bf16 = pack_params(params, dtype=jnp.bfloat16)
    q3 = function_encoder_critic(obs2, act2, env_id2, packed_bf16)
    q3 = jax.block_until_ready(q3)
    assert q3.shape == (B2, 1)
    assert jnp.allclose(q3, q2_ref, atol=5e-2, rtol=5e-2), \
        "Pallas output mismatch (bf16 storage)"

    print("KERNEL_OK")
</pallas_src>

<mosaic_0001>
module attributes {stable_mosaic.version = 11 : i64} {
  func.func @_fe_critic_kernel(%arg0: i32, %arg1: memref<8x8xf32, #tpu.memory_space<vmem>>, %arg2: memref<8x16xf32, #tpu.memory_space<vmem>>, %arg3: memref<8x4xf32, #tpu.memory_space<vmem>>, %arg4: memref<8x32xf32, #tpu.memory_space<vmem>>, %arg5: memref<16x32xf32, #tpu.memory_space<vmem>>, %arg6: memref<4x32xf32, #tpu.memory_space<vmem>>, %arg7: memref<32x32xf32, #tpu.memory_space<vmem>>, %arg8: memref<32x32xf32, #tpu.memory_space<vmem>>, %arg9: memref<8x32xf32, #tpu.memory_space<vmem>>, %arg10: memref<8x32xf32, #tpu.memory_space<vmem>>, %arg11: memref<1x32xf32, #tpu.memory_space<vmem>>, %arg12: memref<1x32xf32, #tpu.memory_space<vmem>>, %arg13: memref<1x32xf32, #tpu.memory_space<vmem>>, %arg14: memref<1x1xf32, #tpu.memory_space<vmem>>, %arg15: memref<1x1x8xf32, #tpu.memory_space<vmem>>) attributes {dimension_semantics = [#tpu.dimension_semantics<parallel>], iteration_bounds = array<i64: 1>, scalar_prefetch = 0 : i64, scratch_operands = 0 : i64, tpu.core_type = #tpu.core_type<tc>, window_params = [{transform_indices = @transform_0, window_bounds = array<i64: 8, 8>}, {transform_indices = @transform_1, window_bounds = array<i64: 8, 16>}, {transform_indices = @transform_2, window_bounds = array<i64: 8, 4>}, {pipeline_mode = #tpu.pipeline_mode<synchronous>, transform_indices = @transform_3, window_bounds = array<i64: 8, 32>}, {pipeline_mode = #tpu.pipeline_mode<synchronous>, transform_indices = @transform_4, window_bounds = array<i64: 16, 32>}, {pipeline_mode = #tpu.pipeline_mode<synchronous>, transform_indices = @transform_5, window_bounds = array<i64: 4, 32>}, {pipeline_mode = #tpu.pipeline_mode<synchronous>, transform_indices = @transform_6, window_bounds = array<i64: 32, 32>}, {pipeline_mode = #tpu.pipeline_mode<synchronous>, transform_indices = @transform_7, window_bounds = array<i64: 32, 32>}, {pipeline_mode = #tpu.pipeline_mode<synchronous>, transform_indices = @transform_8, window_bounds = array<i64: 8, 32>}, {pipeline_mode = #tpu.pipeline_mode<synchronous>, transform_indices = @transform_9, window_bounds = array<i64: 8, 32>}, {pipeline_mode = #tpu.pipeline_mode<synchronous>, transform_indices = @transform_10, window_bounds = array<i64: 1, 32>}, {pipeline_mode = #tpu.pipeline_mode<synchronous>, transform_indices = @transform_11, window_bounds = array<i64: 1, 32>}, {pipeline_mode = #tpu.pipeline_mode<synchronous>, transform_indices = @transform_12, window_bounds = array<i64: 1, 32>}, {pipeline_mode = #tpu.pipeline_mode<synchronous>, transform_indices = @transform_13, window_bounds = array<i64: 1, 1>}, {transform_indices = @transform_14, window_bounds = array<i64: 1, 1, 8>}]} {
    %c0 = arith.constant 0 : index
    %c0_0 = arith.constant 0 : index
    %0 = vector.load %arg1[%c0, %c0_0] : memref<8x8xf32, #tpu.memory_space<vmem>>, vector<8x8xf32>
    %c0_1 = arith.constant 0 : index
    %c0_2 = arith.constant 0 : index
    %1 = vector.load %arg2[%c0_1, %c0_2] : memref<8x16xf32, #tpu.memory_space<vmem>>, vector<8x16xf32>
    %c0_3 = arith.constant 0 : index
    %c0_4 = arith.constant 0 : index
    %2 = vector.load %arg3[%c0_3, %c0_4] : memref<8x4xf32, #tpu.memory_space<vmem>>, vector<8x4xf32>
    %c0_5 = arith.constant 0 : index
    %c0_6 = arith.constant 0 : index
    %3 = vector.load %arg5[%c0_5, %c0_6] : memref<16x32xf32, #tpu.memory_space<vmem>>, vector<16x32xf32>
    %cst = arith.constant dense<0.000000e+00> : vector<8x32xf32>
    %4 = tpu.matmul %1, %3, %cst {dimension_numbers = #tpu.dot_dimension_numbers<[1], [0], [0], [1], [0, 0, 1, 1], [], []>} : vector<8x16xf32>, vector<16x32xf32>, vector<8x32xf32> -> vector<8x32xf32>
    %c0_7 = arith.constant 0 : index
    %c0_8 = arith.constant 0 : index
    %5 = vector.load %arg6[%c0_7, %c0_8] : memref<4x32xf32, #tpu.memory_space<vmem>>, vector<4x32xf32>
    %cst_9 = arith.constant dense<0.000000e+00> : vector<8x32xf32>
    %6 = tpu.matmul %2, %5, %cst_9 {dimension_numbers = #tpu.dot_dimension_numbers<[1], [0], [0], [1], [0, 0, 1, 1], [], []>} : vector<8x4xf32>, vector<4x32xf32>, vector<8x32xf32> -> vector<8x32xf32>
    %7 = arith.addf %4, %6 : vector<8x32xf32>
    %c0_10 = arith.constant 0 : index
    %c0_11 = arith.constant 0 : index
    %8 = vector.load %arg4[%c0_10, %c0_11] : memref<8x32xf32, #tpu.memory_space<vmem>>, vector<8x32xf32>
    %cst_12 = arith.constant dense<0.000000e+00> : vector<8x32xf32>
    %9 = tpu.matmul %0, %8, %cst_12 {dimension_numbers = #tpu.dot_dimension_numbers<[1], [0], [0], [1], [0, 0, 1, 1], [], []>} : vector<8x8xf32>, vector<8x32xf32>, vector<8x32xf32> -> vector<8x32xf32>
    %10 = arith.addf %7, %9 : vector<8x32xf32>
    %c0_13 = arith.constant 0 : index
    %c0_14 = arith.constant 0 : index
    %11 = vector.load %arg11[%c0_13, %c0_14] : memref<1x32xf32, #tpu.memory_space<vmem>>, vector<1x32xf32>
    %12 = vector.broadcast %11 : vector<1x32xf32> to vector<8x32xf32>
    %13 = arith.addf %10, %12 : vector<8x32xf32>
    %cst_15 = arith.constant 0.000000e+00 : f32
    %14 = vector.broadcast %cst_15 : f32 to vector<8x32xf32>
    %15 = arith.maximumf %13, %14 : vector<8x32xf32>
    %c0_16 = arith.constant 0 : index
    %c0_17 = arith.constant 0 : index
    %16 = vector.load %arg7[%c0_16, %c0_17] : memref<32x32xf32, #tpu.memory_space<vmem>>, vector<32x32xf32>
    %cst_18 = arith.constant dense<0.000000e+00> : vector<8x32xf32>
    %17 = tpu.matmul %15, %16, %cst_18 {dimension_numbers = #tpu.dot_dimension_numbers<[1], [0], [0], [1], [0, 0, 1, 1], [], []>} : vector<8x32xf32>, vector<32x32xf32>, vector<8x32xf32> -> vector<8x32xf32>
    %c0_19 = arith.constant 0 : index
    %c0_20 = arith.constant 0 : index
    %18 = vector.load %arg12[%c0_19, %c0_20] : memref<1x32xf32, #tpu.memory_space<vmem>>, vector<1x32xf32>
    %19 = vector.broadcast %18 : vector<1x32xf32> to vector<8x32xf32>
    %20 = arith.addf %17, %19 : vector<8x32xf32>
    %c0_21 = arith.constant 0 : index
    %c0_22 = arith.constant 0 : index
    %21 = vector.load %arg8[%c0_21, %c0_22] : memref<32x32xf32, #tpu.memory_space<vmem>>, vector<32x32xf32>
    %cst_23 = arith.constant dense<0.000000e+00> : vector<8x32xf32>
    %22 = tpu.matmul %20, %21, %cst_23 {dimension_numbers = #tpu.dot_dimension_numbers<[1], [0], [0], [1], [0, 0, 1, 1], [], []>} : vector<8x32xf32>, vector<32x32xf32>, vector<8x32xf32> -> vector<8x32xf32>
    %c0_24 = arith.constant 0 : index
    %c0_25 = arith.constant 0 : index
    %23 = vector.load %arg9[%c0_24, %c0_25] : memref<8x32xf32, #tpu.memory_space<vmem>>, vector<8x32xf32>
    %cst_26 = arith.constant dense<0.000000e+00> : vector<8x32xf32>
    %24 = tpu.matmul %0, %23, %cst_26 {dimension_numbers = #tpu.dot_dimension_numbers<[1], [0], [0], [1], [0, 0, 1, 1], [], []>} : vector<8x8xf32>, vector<8x32xf32>, vector<8x32xf32> -> vector<8x32xf32>
    %25 = arith.addf %22, %24 : vector<8x32xf32>
    %c0_27 = arith.constant 0 : index
    %c0_28 = arith.constant 0 : index
    %26 = vector.load %arg13[%c0_27, %c0_28] : memref<1x32xf32, #tpu.memory_space<vmem>>, vector<1x32xf32>
    %27 = vector.broadcast %26 : vector<1x32xf32> to vector<8x32xf32>
    %28 = arith.addf %25, %27 : vector<8x32xf32>
    %cst_29 = arith.constant 0.000000e+00 : f32
    %29 = vector.broadcast %cst_29 : f32 to vector<8x32xf32>
    %30 = arith.maximumf %28, %29 : vector<8x32xf32>
    %c0_30 = arith.constant 0 : index
    %c0_31 = arith.constant 0 : index
    %31 = vector.load %arg10[%c0_30, %c0_31] : memref<8x32xf32, #tpu.memory_space<vmem>>, vector<8x32xf32>
    %cst_32 = arith.constant dense<0.000000e+00> : vector<8x8xf32>
    %32 = tpu.matmul %31, %30, %cst_32 {dimension_numbers = #tpu.dot_dimension_numbers<[1], [1], [0], [0], [0, 0, 1, 0], [], []>} : vector<8x32xf32>, vector<8x32xf32>, vector<8x8xf32> -> vector<8x8xf32>
    %33 = vector.extract_strided_slice %32 {offsets = [0, 0], sizes = [1, 8], strides = [1, 1]} : vector<8x8xf32> to vector<1x8xf32>
    %c0_33 = arith.constant 0 : index
    %c0_34 = arith.constant 0 : index
    %34 = vector.load %arg14[%c0_33, %c0_34] : memref<1x1xf32, #tpu.memory_space<vmem>>, vector<1x1xf32>
    %35 = vector.broadcast %34 : vector<1x1xf32> to vector<1x8xf32>
    %36 = arith.addf %33, %35 : vector<1x8xf32>
    %c0_35 = arith.constant 0 : index
    %c0_36 = arith.constant 0 : index
    %c0_37 = arith.constant 0 : index
    %37 = vector.load %arg15[%c0_35, %c0_36, %c0_37] : memref<1x1x8xf32, #tpu.memory_space<vmem>>, vector<1x1x8xf32>
    %38 = vector.shape_cast %37 : vector<1x1x8xf32> to vector<1x8xf32>
    %39 = vector.shape_cast %36 : vector<1x8xf32> to vector<1x1x8xf32>
    tpu.vector_store %arg15[%c0_35, %c0_36, %c0_37], %39 {strides = array<i32>} : memref<1x1x8xf32, #tpu.memory_space<vmem>>, vector<1x1x8xf32>,
    return
  }
  func.func @transform_0(%arg0: i32) -> (i32, i32) {
    %c0_i32 = arith.constant 0 : i32
    %c0_i32_0 = arith.constant 0 : i32
    return %arg0, %c0_i32 : i32, i32
  }
  func.func @transform_1(%arg0: i32) -> (i32, i32) {
    %c0_i32 = arith.constant 0 : i32
    %c0_i32_0 = arith.constant 0 : i32
    return %arg0, %c0_i32 : i32, i32
  }
  func.func @transform_2(%arg0: i32) -> (i32, i32) {
    %c0_i32 = arith.constant 0 : i32
    %c0_i32_0 = arith.constant 0 : i32
    return %arg0, %c0_i32 : i32, i32
  }
  func.func @transform_3(%arg0: i32) -> (i32, i32) {
    %c0_i32 = arith.constant 0 : i32
    %c0_i32_0 = arith.constant 0 : i32
    %c0_i32_1 = arith.constant 0 : i32
    return %c0_i32, %c0_i32_0 : i32, i32
  }
  func.func @transform_4(%arg0: i32) -> (i32, i32) {
    %c0_i32 = arith.constant 0 : i32
    %c0_i32_0 = arith.constant 0 : i32
    %c0_i32_1 = arith.constant 0 : i32
    return %c0_i32, %c0_i32_0 : i32, i32
  }
  func.func @transform_5(%arg0: i32) -> (i32, i32) {
    %c0_i32 = arith.constant 0 : i32
    %c0_i32_0 = arith.constant 0 : i32
    %c0_i32_1 = arith.constant 0 : i32
    return %c0_i32, %c0_i32_0 : i32, i32
  }
  func.func @transform_6(%arg0: i32) -> (i32, i32) {
    %c0_i32 = arith.constant 0 : i32
    %c0_i32_0 = arith.constant 0 : i32
    %c0_i32_1 = arith.constant 0 : i32
    return %c0_i32, %c0_i32_0 : i32, i32
  }
  func.func @transform_7(%arg0: i32) -> (i32, i32) {
    %c0_i32 = arith.constant 0 : i32
    %c0_i32_0 = arith.constant 0 : i32
    %c0_i32_1 = arith.constant 0 : i32
    return %c0_i32, %c0_i32_0 : i32, i32
  }
  func.func @transform_8(%arg0: i32) -> (i32, i32) {
    %c0_i32 = arith.constant 0 : i32
    %c0_i32_0 = arith.constant 0 : i32
    %c0_i32_1 = arith.constant 0 : i32
    return %c0_i32, %c0_i32_0 : i32, i32
  }
  func.func @transform_9(%arg0: i32) -> (i32, i32) {
    %c0_i32 = arith.constant 0 : i32
    %c0_i32_0 = arith.constant 0 : i32
    %c0_i32_1 = arith.constant 0 : i32
    return %c0_i32, %c0_i32_0 : i32, i32
  }
  func.func @transform_10(%arg0: i32) -> (i32, i32) {
    %c0_i32 = arith.constant 0 : i32
    %c0_i32_0 = arith.constant 0 : i32
    %c0_i32_1 = arith.constant 0 : i32
    return %c0_i32, %c0_i32_0 : i32, i32
  }
  func.func @transform_11(%arg0: i32) -> (i32, i32) {
    %c0_i32 = arith.constant 0 : i32
    %c0_i32_0 = arith.constant 0 : i32
    %c0_i32_1 = arith.constant 0 : i32
    return %c0_i32, %c0_i32_0 : i32, i32
  }
  func.func @transform_12(%arg0: i32) -> (i32, i32) {
    %c0_i32 = arith.constant 0 : i32
    %c0_i32_0 = arith.constant 0 : i32
    %c0_i32_1 = arith.constant 0 : i32
    return %c0_i32, %c0_i32_0 : i32, i32
  }
  func.func @transform_13(%arg0: i32) -> (i32, i32) {
    %c0_i32 = arith.constant 0 : i32
    %c0_i32_0 = arith.constant 0 : i32
    %c0_i32_1 = arith.constant 0 : i32
    return %c0_i32, %c0_i32_0 : i32, i32
  }
  func.func @transform_14(%arg0: i32) -> (i32, i32, i32) {
    %c0_i32 = arith.constant 0 : i32
    %c0_i32_0 = arith.constant 0 : i32
    %c0_i32_1 = arith.constant 0 : i32
    return %arg0, %c0_i32, %c0_i32_0 : i32, i32, i32
  }
}

</mosaic_0001>

<llo_original>
// kernel: tpu_custom_call.1
$region0: #{tpu_custom_call.1}
  #allocation0 [shape = 'u32[]', space=smem, size = 0x4, offset = 0x4, fixed_abs, tag = 'smem constant byte address 0x4 - core index']
  #allocation1 [shape = 'u32[144,128]{1,0:T(1,128)}', space=vmem, size = 0x12000, scoped, tag = 'internal scratch']
  #allocation2 [shape = 'f32[1,1]{1,0:T(1,128)S(1)}', space=vmem, size = 0x200, scoped, tag = 'scoped memory for tpu_custom_call.1']
  %s0 = inlined_call_operand.hbm [shape: f32[8,8], index: 0, kind: input, shape index: {}]
  %s1 = inlined_call_operand.hbm [shape: f32[8,16], index: 1, kind: input, shape index: {}]
  %s2 = inlined_call_operand.vmem [shape: f32[8,4], index: 2, kind: input, shape index: {}]
  %s3 = inlined_call_operand.hbm [shape: f32[8,32], index: 3, kind: input, shape index: {}]
  %s4 = inlined_call_operand.vmem [shape: f32[16,32], index: 4, kind: input, shape index: {}]
  %s5 = inlined_call_operand.hbm [shape: f32[4,32], index: 5, kind: input, shape index: {}]
  %s6 = inlined_call_operand.hbm [shape: f32[32,32], index: 6, kind: input, shape index: {}]
  %s7 = inlined_call_operand.hbm [shape: f32[32,32], index: 7, kind: input, shape index: {}]
  %s8 = inlined_call_operand.vmem [shape: f32[8,32], index: 8, kind: input, shape index: {}]
  %s9 = inlined_call_operand.hbm [shape: f32[8,32], index: 9, kind: input, shape index: {}]
  %s10 = inlined_call_operand.vmem [shape: f32[1,32], index: 10, kind: input, shape index: {}]
  %s11 = inlined_call_operand.vmem [shape: f32[1,32], index: 11, kind: input, shape index: {}]
  %s12 = inlined_call_operand.vmem [shape: f32[1,32], index: 12, kind: input, shape index: {}]
  %s13 = inlined_call_operand.<no memory space> [shape: f32[1,1], index: 13, kind: input, shape index: {}]
  %s14 = inlined_call_operand.hbm [shape: f32[1,1,8], index: 14, kind: output, shape index: {}]
  %s15 = sld [smem:[#allocation0]]
  $region94: #{tpu_custom_call.1} parent=0
    _
  %s17 = ssub.s32 1, %s15
  %s18 = scalar_select 0, %s17, %s15
  %v19 = vstv %s13
  %20 = vst [vmem:[#allocation2] sm:$0x1] %v19
  $region1: #{tpu_custom_call.1} parent=0
    #allocation3 [shape = 'u8[4096]{0}', space=vmem, size = 0x1000, scoped, tag = 'input window, operand 0, single buffered']
    #allocation4 [shape = 's32[1]{0}', space=sflag, size = 0x4, scoped, tag = 'scoped memory for tpu_custom_call.1']
    #allocation5 [shape = 's32[1]{0}', space=sflag, size = 0x4, scoped, tag = 'scoped memory for tpu_custom_call.1']
    #allocation6 [shape = 'u8[4096]{0}', space=vmem, size = 0x1000, scoped, tag = 'input window, operand 1, single buffered']
    #allocation7 [shape = 's32[1]{0}', space=sflag, size = 0x4, scoped, tag = 'scoped memory for tpu_custom_call.1']
    #allocation8 [shape = 'u8[4096]{0}', space=vmem, size = 0x1000, scoped, tag = 'input window, operand 3, single buffered']
    #allocation9 [shape = 'u8[2048]{0}', space=vmem, size = 0x800, scoped, tag = 'input window, operand 5, single buffered']
    #allocation10 [shape = 's32[1]{0}', space=sflag, size = 0x4, scoped, tag = 'scoped memory for tpu_custom_call.1']
    #allocation11 [shape = 'u8[16384]{0}', space=vmem, size = 0x4000, scoped, tag = 'input window, operand 6, single buffered']
    #allocation12 [shape = 'u8[16384]{0}', space=vmem, size = 0x4000, scoped, tag = 'input window, operand 7, single buffered']
    #allocation13 [shape = 's32[1]{0}', space=sflag, size = 0x4, scoped, tag = 'scoped memory for tpu_custom_call.1']
    #allocation14 [shape = 'u8[4096]{0}', space=vmem, size = 0x1000, scoped, tag = 'input window, operand 9, single buffered']
    #allocation15 [shape = 'u8[512]{0}', space=vmem, size = 0x400, scoped, tag = 'output window, operand 0, single buffered']
    %21 = vsyncpa [#allocation4], 0
    %22 = vsyncpa [#allocation7], 0
    %23 = vsyncpa [#allocation10], 0
    %24 = vsyncpa [#allocation13], 0
    %25 = vsyncpa [#allocation5], 0
    // Predicated region
    $region2: #{tpu_custom_call.1} parent=1 // pred_check
      _
    $region3: #{tpu_custom_call.1} parent=1 // pred_check_branch
      %27 = sbr.rel (0) target = $region5
    $region4: #{tpu_custom_call.1} parent=1 // pred_region
      %s29 = ssub.s32 128, 128
      %30 = vsyncadd [#allocation4], %s29
      %s32 = sshll.u32 [#allocation3], 4
      %s33 = int_to_ptr.vmem [resolvable:$true] %s32
      %35 = dma.hbm_to_vmem [thread:$0]  %s0, 128, %s33, [#allocation4]
    $region5: #{tpu_custom_call.1} parent=1 // pred_fallthru
      _
    // Predicated region
    $region6: #{tpu_custom_call.1} parent=1 // pred_check
      _
    $region7: #{tpu_custom_call.1} parent=1 // pred_check_branch
      %37 = sbr.rel (0) target = $region9
    $region8: #{tpu_custom_call.1} parent=1 // pred_region
      %s39 = ssub.s32 128, 128
      %40 = vsyncadd [#allocation7], %s39
      %s42 = sshll.u32 [#allocation6], 4
      %s43 = int_to_ptr.vmem [resolvable:$true] %s42
      %45 = dma.hbm_to_vmem [thread:$0]  %s1, 128, %s43, [#allocation7]
    $region9: #{tpu_custom_call.1} parent=1 // pred_fallthru
      _
    // Predicated region
    $region10: #{tpu_custom_call.1} parent=1 // pred_check
      _
    $region11: #{tpu_custom_call.1} parent=1 // pred_check_branch
      %47 = sbr.rel (0) target = $region13
    $region12: #{tpu_custom_call.1} parent=1 // pred_region
      _
    $region13: #{tpu_custom_call.1} parent=1 // pred_fallthru
      _
    // Predicated region
    $region14: #{tpu_custom_call.1} parent=1 // pred_check
      _
    $region15: #{tpu_custom_call.1} parent=1 // pred_check_branch
      %49 = sbr.rel (0) target = $region17
    $region16: #{tpu_custom_call.1} parent=1 // pred_region
      %s51 = ssub.s32 128, 128
      %52 = vsyncadd [#allocation7], %s51
      %s54 = sshll.u32 [#allocation8], 4
      %s55 = int_to_ptr.vmem [resolvable:$true] %s54
      %57 = dma.hbm_to_vmem [thread:$0]  %s3, 128, %s55, [#allocation7]
    $region17: #{tpu_custom_call.1} parent=1 // pred_fallthru
      _
    // Predicated region
    $region18: #{tpu_custom_call.1} parent=1 // pred_check
      _
    $region19: #{tpu_custom_call.1} parent=1 // pred_check_branch
      %59 = sbr.rel (0) target = $region21
    $region20: #{tpu_custom_call.1} parent=1 // pred_region
      _
    $region21: #{tpu_custom_call.1} parent=1 // pred_fallthru
      _
    // Predicated region
    $region22: #{tpu_custom_call.1} parent=1 // pred_check
      _
    $region23: #{tpu_custom_call.1} parent=1 // pred_check_branch
      %61 = sbr.rel (0) target = $region25
    $region24: #{tpu_custom_call.1} parent=1 // pred_region
      %s63 = ssub.s32 64, 64
      %64 = vsyncadd [#allocation10], %s63
      %s66 = sshll.u32 [#allocation9], 4
      %s67 = int_to_ptr.vmem [resolvable:$true] %s66
      %69 = dma.hbm_to_vmem [thread:$0]  %s5, 64, %s67, [#allocation10]
    $region25: #{tpu_custom_call.1} parent=1 // pred_fallthru
      _
    // Predicated region
    $region26: #{tpu_custom_call.1} parent=1 // pred_check
      _
    $region27: #{tpu_custom_call.1} parent=1 // pred_check_branch
      %71 = sbr.rel (0) target = $region29
    $region28: #{tpu_custom_call.1} parent=1 // pred_region
      %s73 = ssub.s32 512, 512
      %74 = vsyncadd [#allocation10], %s73
      %s75 = sshll.u32 [#allocation11], 4
      %s76 = int_to_ptr.vmem [resolvable:$true] %s75
      %81 = dma.hbm_to_vmem [thread:$0]  %s6, 512, %s76, [#allocation10], 128, 128, 8
    $region29: #{tpu_custom_call.1} parent=1 // pred_fallthru
      _
    // Predicated region
    $region30: #{tpu_custom_call.1} parent=1 // pred_check
      _
    $region31: #{tpu_custom_call.1} parent=1 // pred_check_branch
      %83 = sbr.rel (0) target = $region33
    $region32: #{tpu_custom_call.1} parent=1 // pred_region
      %s85 = ssub.s32 512, 512
      %86 = vsyncadd [#allocation13], %s85
      %s87 = sshll.u32 [#allocation12], 4
      %s88 = int_to_ptr.vmem [resolvable:$true] %s87
      %93 = dma.hbm_to_vmem [thread:$0]  %s7, 512, %s88, [#allocation13], 128, 128, 8
    $region33: #{tpu_custom_call.1} parent=1 // pred_fallthru
      _
    // Predicated region
    $region34: #{tpu_custom_call.1} parent=1 // pred_check
      _
    $region35: #{tpu_custom_call.1} parent=1 // pred_check_branch
      %95 = sbr.rel (0) target = $region37
    $region36: #{tpu_custom_call.1} parent=1 // pred_region
      _
    $region37: #{tpu_custom_call.1} parent=1 // pred_fallthru
      _
    // Predicated region
    $region38: #{tpu_custom_call.1} parent=1 // pred_check
      _
    $region39: #{tpu_custom_call.1} parent=1 // pred_check_branch
      %97 = sbr.rel (0) target = $region41
    $region40: #{tpu_custom_call.1} parent=1 // pred_region
      %s99 = ssub.s32 128, 128
      %100 = vsyncadd [#allocation13], %s99
      %s102 = sshll.u32 [#allocation14], 4
      %s103 = int_to_ptr.vmem [resolvable:$true] %s102
      %105 = dma.hbm_to_vmem [thread:$0]  %s9, 128, %s103, [#allocation13]
    $region41: #{tpu_custom_call.1} parent=1 // pred_fallthru
      _
    // Predicated region
    $region42: #{tpu_custom_call.1} parent=1 // pred_check
      _
    $region43: #{tpu_custom_call.1} parent=1 // pred_check_branch
      %107 = sbr.rel (0) target = $region45
    $region44: #{tpu_custom_call.1} parent=1 // pred_region
      _
    $region45: #{tpu_custom_call.1} parent=1 // pred_fallthru
      _
    // Predicated region
    $region46: #{tpu_custom_call.1} parent=1 // pred_check
      _
    $region47: #{tpu_custom_call.1} parent=1 // pred_check_branch
      %109 = sbr.rel (0) target = $region49
    $region48: #{tpu_custom_call.1} parent=1 // pred_region
      _
    $region49: #{tpu_custom_call.1} parent=1 // pred_fallthru
      _
    // Predicated region
    $region50: #{tpu_custom_call.1} parent=1 // pred_check
      _
    $region51: #{tpu_custom_call.1} parent=1 // pred_check_branch
      %111 = sbr.rel (0) target = $region53
    $region52: #{tpu_custom_call.1} parent=1 // pred_region
      _
    $region53: #{tpu_custom_call.1} parent=1 // pred_fallthru
      _
    // Predicated region
    $region54: #{tpu_custom_call.1} parent=1 // pred_check
      _
    $region55: #{tpu_custom_call.1} parent=1 // pred_check_branch
      %113 = sbr.rel (0) target = $region57
    $region56: #{tpu_custom_call.1} parent=1 // pred_region
      _
    $region57: #{tpu_custom_call.1} parent=1 // pred_fallthru
      _
    // Predicated region
    $region58: #{tpu_custom_call.1} parent=1 // pred_check
      _
    $region59: #{tpu_custom_call.1} parent=1 // pred_check_branch
      %115 = sbr.rel (0) target = $region61
    $region60: #{tpu_custom_call.1} parent=1 // pred_region
      %116 = dma.done [#allocation4], 128
    $region61: #{tpu_custom_call.1} parent=1 // pred_fallthru
      _
    // Predicated region
    $region62: #{tpu_custom_call.1} parent=1 // pred_check
      _
    $region63: #{tpu_custom_call.1} parent=1 // pred_check_branch
      %118 = sbr.rel (0) target = $region65
    $region64: #{tpu_custom_call.1} parent=1 // pred_region
      %119 = dma.done [#allocation7], 128
    $region65: #{tpu_custom_call.1} parent=1 // pred_fallthru
      _
    // Predicated region
    $region66: #{tpu_custom_call.1} parent=1 // pred_check
      _
    $region67: #{tpu_custom_call.1} parent=1 // pred_check_branch
      %121 = sbr.rel (0) target = $region69
    $region68: #{tpu_custom_call.1} parent=1 // pred_region
      %122 = dma.done [#allocation7], 128
    $region69: #{tpu_custom_call.1} parent=1 // pred_fallthru
      _
    // Predicated region
    $region70: #{tpu_custom_call.1} parent=1 // pred_check
      _
    $region71: #{tpu_custom_call.1} parent=1 // pred_check_branch
      %124 = sbr.rel (0) target = $region73
    $region72: #{tpu_custom_call.1} parent=1 // pred_region
      %125 = dma.done [#allocation10], 64
    $region73: #{tpu_custom_call.1} parent=1 // pred_fallthru
      _
    // Predicated region
    $region74: #{tpu_custom_call.1} parent=1 // pred_check
      _
    $region75: #{tpu_custom_call.1} parent=1 // pred_check_branch
      %127 = sbr.rel (0) target = $region77
    $region76: #{tpu_custom_call.1} parent=1 // pred_region
      %128 = dma.done [#allocation10], 512
    $region77: #{tpu_custom_call.1} parent=1 // pred_fallthru
      _
    // Predicated region
    $region78: #{tpu_custom_call.1} parent=1 // pred_check
      _
    $region79: #{tpu_custom_call.1} parent=1 // pred_check_branch
      %130 = sbr.rel (0) target = $region81
    $region80: #{tpu_custom_call.1} parent=1 // pred_region
      %131 = dma.done [#allocation13], 512
    $region81: #{tpu_custom_call.1} parent=1 // pred_fallthru
      _
    // Predicated region
    $region82: #{tpu_custom_call.1} parent=1 // pred_check
      _
    $region83: #{tpu_custom_call.1} parent=1 // pred_check_branch
      %133 = sbr.rel (0) target = $region85
    $region84: #{tpu_custom_call.1} parent=1 // pred_region
      %134 = dma.done [#allocation13], 128
    $region85: #{tpu_custom_call.1} parent=1 // pred_fallthru
      _
    %v135 = vld [vmem:[#allocation3] sm:$0xff]
    %v136 = vld [vmem:[#allocation6] sm:$0xff]
    %v137 = vld [vmem:[%s2] sm:$0xff]
    %v138 = vld [vmem:[%s4] sm:$0xff]
    %v139 = vld [vmem:[%s4 + $0x8] sm:$0xff]
    %v140 = vld [vmem:[#allocation9] sm:$0xf]
    %vm141 = vcmask 31744
    %v143 = vsel %vm141, %v137, 0
    %vm145 = vcmask 1043456
    %v147 = vsel %vm145, %v140, 0
    %149 = vmatprep.subr.mxu0 0.0
    %150 = vmatpush1.msra.mxu0 0.0
    %151 = vmatprep.subr.mxu0 0.0
    %152 = vmatpush1.msra.mxu0 0.0
    %153 = vmatprep.subr.mxu0 0.0
    %154 = vmatpush1.msra.mxu0 0.0
    %155 = vmatprep.subr.mxu0 0.0
    %156 = vmatpush1.msra.mxu0 0.0
    %157 = vmatprep.subr.mxu0 0.0
    %158 = vmatpush1.msra.mxu0 0.0
    %159 = vmatprep.subr.mxu0 0.0
    %160 = vmatpush1.msra.mxu0 0.0
    %161 = vmatprep.subr.mxu0 0.0
    %162 = vmatpush1.msra.mxu0 0.0
    %163 = vmatprep.subr.mxu0 0.0
    %164 = vmatpush1.msra.mxu0 0.0
    %165 = vmatprep.subr.mxu0 0.0
    %166 = vmatpush1.msra.mxu0 0.0
    %167 = vmatprep.subr.mxu0 0.0
    %168 = vmatpush1.msra.mxu0 0.0
    %169 = vmatprep.subr.mxu0 0.0
    %170 = vmatpush1.msra.mxu0 0.0
    %171 = vmatprep.subr.mxu0 0.0
    %172 = vmatpush1.msra.mxu0 0.0
    %173 = vmatprep.subr.mxu0 0.0
    %174 = vmatpush1.msra.mxu0 0.0
    %175 = vmatprep.subr.mxu0 0.0
    %176 = vmatpush1.msra.mxu0 0.0
    %177 = vmatprep.subr.mxu0 0.0
    %178 = vmatpush1.msra.mxu0 0.0
    %179 = vmatprep.subr.mxu0 0.0
    %180 = vmatpush1.msra.mxu0 %v147
    %181 = vmatprep.subr.mxu0 0.0
    %182 = vmatpush2.msra.mxu0 0.0
    %183 = vmatprep.subr.mxu0 0.0
    %184 = vmatpush2.msra.mxu0 0.0
    %185 = vmatprep.subr.mxu0 0.0
    %186 = vmatpush2.msra.mxu0 0.0
    %187 = vmatprep.subr.mxu0 0.0
    %188 = vmatpush2.msra.mxu0 0.0
    %189 = vmatprep.subr.mxu0 0.0
    %190 = vmatpush2.msra.mxu0 0.0
    %191 = vmatprep.subr.mxu0 0.0
    %192 = vmatpush2.msra.mxu0 0.0
    %193 = vmatprep.subr.mxu0 0.0
    %194 = vmatpush2.msra.mxu0 0.0
    %195 = vmatprep.subr.mxu0 0.0
    %196 = vmatpush2.msra.mxu0 0.0
    %197 = vmatprep.subr.mxu0 0.0
    %198 = vmatpush2.msra.mxu0 0.0
    %199 = vmatprep.subr.mxu0 0.0
    %200 = vmatpush2.msra.mxu0 0.0
    %201 = vmatprep.subr.mxu0 0.0
    %202 = vmatpush2.msra.mxu0 0.0
    %203 = vmatprep.subr.mxu0 0.0
    %204 = vmatpush2.msra.mxu0 0.0
    %205 = vmatprep.subr.mxu0 0.0
    %206 = vmatpush2.msra.mxu0 0.0
    %207 = vmatprep.subr.mxu0 0.0
    %208 = vmatpush2.msra.mxu0 0.0
    %209 = vmatprep.subr.mxu0 0.0
    %210 = vmatpush2.msra.mxu0 0.0
    %211 = vmatprep.subr.mxu0 0.0
    %212 = vmatpush2.msra.mxu0 0.0
    %213 = vmatprep.mubr.f32.mxu0 0.0
    %214 = vmatmul.mubr.f32.gmra.mxu0 %v143
    %v215 = vpop.f32.mrf.mxu0
    %v216 = vadd.f32 0.0, %v215
    %v217 = vpop.f32.mrf.mxu0
    %218 = vdwg.mxu0
    %vm219 = vcmask 130048
    %v221 = vsel %vm219, %v136, 0
    %223 = vmatprep.subr.mxu0 0.0
    %224 = vmatpush1.msra.mxu0 0.0
    %225 = vmatprep.subr.mxu0 0.0
    %226 = vmatpush1.msra.mxu0 0.0
    %227 = vmatprep.subr.mxu0 0.0
    %228 = vmatpush1.msra.mxu0 0.0
    %229 = vmatprep.subr.mxu0 0.0
    %230 = vmatpush1.msra.mxu0 0.0
    %231 = vmatprep.subr.mxu0 0.0
    %232 = vmatpush1.msra.mxu0 0.0
    %233 = vmatprep.subr.mxu0 0.0
    %234 = vmatpush1.msra.mxu0 0.0
    %235 = vmatprep.subr.mxu0 0.0
    %236 = vmatpush1.msra.mxu0 0.0
    %237 = vmatprep.subr.mxu0 0.0
    %238 = vmatpush1.msra.mxu0 0.0
    %239 = vmatprep.subr.mxu0 0.0
    %240 = vmatpush1.msra.mxu0 0.0
    %241 = vmatprep.subr.mxu0 0.0
    %242 = vmatpush1.msra.mxu0 0.0
    %243 = vmatprep.subr.mxu0 0.0
    %244 = vmatpush1.msra.mxu0 0.0
    %245 = vmatprep.subr.mxu0 0.0
    %246 = vmatpush1.msra.mxu0 0.0
    %247 = vmatprep.subr.mxu0 0.0
    %248 = vmatpush1.msra.mxu0 0.0
    %249 = vmatprep.subr.mxu0 0.0
    %250 = vmatpush1.msra.mxu0 0.0
    %251 = vmatprep.subr.mxu0 0.0
    %252 = vmatpush1.msra.mxu0 %v139
    %253 = vmatprep.subr.mxu0 0.0
    %254 = vmatpush1.msra.mxu0 %v138
    %255 = vmatprep.subr.mxu0 0.0
    %256 = vmatpush2.msra.mxu0 0.0
    %257 = vmatprep.subr.mxu0 0.0
    %258 = vmatpush2.msra.mxu0 0.0
    %259 = vmatprep.subr.mxu0 0.0
    %260 = vmatpush2.msra.mxu0 0.0
    %261 = vmatprep.subr.mxu0 0.0
    %262 = vmatpush2.msra.mxu0 0.0
    %263 = vmatprep.subr.mxu0 0.0
    %264 = vmatpush2.msra.mxu0 0.0
    %265 = vmatprep.subr.mxu0 0.0
    %266 = vmatpush2.msra.mxu0 0.0
    %267 = vmatprep.subr.mxu0 0.0
    %268 = vmatpush2.msra.mxu0 0.0
    %269 = vmatprep.subr.mxu0 0.0
    %270 = vmatpush2.msra.mxu0 0.0
    %271 = vmatprep.subr.mxu0 0.0
    %272 = vmatpush2.msra.mxu0 0.0
    %273 = vmatprep.subr.mxu0 0.0
    %274 = vmatpush2.msra.mxu0 0.0
    %275 = vmatprep.subr.mxu0 0.0
    %276 = vmatpush2.msra.mxu0 0.0
    %277 = vmatprep.subr.mxu0 0.0
    %278 = vmatpush2.msra.mxu0 0.0
    %279 = vmatprep.subr.mxu0 0.0
    %280 = vmatpush2.msra.mxu0 0.0
    %281 = vmatprep.subr.mxu0 0.0
    %282 = vmatpush2.msra.mxu0 0.0
    %283 = vmatprep.subr.mxu0 0.0
    %284 = vmatpush2.msra.mxu0 0.0
    %285 = vmatprep.subr.mxu0 0.0
    %286 = vmatpush2.msra.mxu0 0.0
    %287 = vmatprep.mubr.f32.mxu0 0.0
    %288 = vmatmul.mubr.f32.gmra.mxu0 %v221
    %v289 = vpop.f32.mrf.mxu0
    %v290 = vadd.f32 %v216, %v289
    %v291 = vpop.f32.mrf.mxu0
    %292 = vdwg.mxu0
    %v293 = vld [vmem:[#allocation8] sm:$0xff]
    %vm294 = vcmask 64512
    %v296 = vsel %vm294, %v135, 0
    %298 = vmatprep.subr.mxu0 0.0
    %299 = vmatpush1.msra.mxu0 0.0
    %300 = vmatprep.subr.mxu0 0.0
    %301 = vmatpush1.msra.mxu0 0.0
    %302 = vmatprep.subr.mxu0 0.0
    %303 = vmatpush1.msra.mxu0 0.0
    %304 = vmatprep.subr.mxu0 0.0
    %305 = vmatpush1.msra.mxu0 0.0
    %306 = vmatprep.subr.mxu0 0.0
    %307 = vmatpush1.msra.mxu0 0.0
    %308 = vmatprep.subr.mxu0 0.0
    %309 = vmatpush1.msra.mxu0 0.0
    %310 = vmatprep.subr.mxu0 0.0
    %311 = vmatpush1.msra.mxu0 0.0
    %312 = vmatprep.subr.mxu0 0.0
    %313 = vmatpush1.msra.mxu0 0.0
    %314 = vmatprep.subr.mxu0 0.0
    %315 = vmatpush1.msra.mxu0 0.0
    %316 = vmatprep.subr.mxu0 0.0
    %317 = vmatpush1.msra.mxu0 0.0
    %318 = vmatprep.subr.mxu0 0.0
    %319 = vmatpush1.msra.mxu0 0.0
    %320 = vmatprep.subr.mxu0 0.0
    %321 = vmatpush1.msra.mxu0 0.0
    %322 = vmatprep.subr.mxu0 0.0
    %323 = vmatpush1.msra.mxu0 0.0
    %324 = vmatprep.subr.mxu0 0.0
    %325 = vmatpush1.msra.mxu0 0.0
    %326 = vmatprep.subr.mxu0 0.0
    %327 = vmatpush1.msra.mxu0 0.0
    %328 = vmatprep.subr.mxu0 0.0
    %329 = vmatpush1.msra.mxu0 %v293
    %330 = vmatprep.subr.mxu0 0.0
    %331 = vmatpush2.msra.mxu0 0.0
    %332 = vmatprep.subr.mxu0 0.0
    %333 = vmatpush2.msra.mxu0 0.0
    %334 = vmatprep.subr.mxu0 0.0
    %335 = vmatpush2.msra.mxu0 0.0
    %336 = vmatprep.subr.mxu0 0.0
    %337 = vmatpush2.msra.mxu0 0.0
    %338 = vmatprep.subr.mxu0 0.0
    %339 = vmatpush2.msra.mxu0 0.0
    %340 = vmatprep.subr.mxu0 0.0
    %341 = vmatpush2.msra.mxu0 0.0
    %342 = vmatprep.subr.mxu0 0.0
    %343 = vmatpush2.msra.mxu0 0.0
    %344 = vmatprep.subr.mxu0 0.0
    %345 = vmatpush2.msra.mxu0 0.0
    %346 = vmatprep.subr.mxu0 0.0
    %347 = vmatpush2.msra.mxu0 0.0
    %348 = vmatprep.subr.mxu0 0.0
    %349 = vmatpush2.msra.mxu0 0.0
    %350 = vmatprep.subr.mxu0 0.0
    %351 = vmatpush2.msra.mxu0 0.0
    %352 = vmatprep.subr.mxu0 0.0
    %353 = vmatpush2.msra.mxu0 0.0
    %354 = vmatprep.subr.mxu0 0.0
    %355 = vmatpush2.msra.mxu0 0.0
    %356 = vmatprep.subr.mxu0 0.0
    %357 = vmatpush2.msra.mxu0 0.0
    %358 = vmatprep.subr.mxu0 0.0
    %359 = vmatpush2.msra.mxu0 0.0
    %360 = vmatprep.subr.mxu0 0.0
    %361 = vmatpush2.msra.mxu0 0.0
    %362 = vmatprep.mubr.f32.mxu0 0.0
    %363 = vmatmul.mubr.f32.gmra.mxu0 %v296
    %v364 = vpop.f32.mrf.mxu0
    %v365 = vadd.f32 0.0, %v364
    %v366 = vpop.f32.mrf.mxu0
    %367 = vdwg.mxu0
    %v368 = vadd.f32 %v290, %v365
    %v369 = vld [vmem:[%s10] sm:$0x1]
    %v371 = vlaneseq
    %v372 = vshrl.u32 %v371, 7
    %v373 = vsub.s32 0, %v372
    %v374 = vrot.slane %v369, %v373
    %v376 = vadd.f32 %v368, %v374
    %v377 = vmax.f32 %v376, 0.0
    %v378 = vld [vmem:[#allocation11] sm:$0xff]
    %v379 = vld [vmem:[#allocation11 + $0x8] sm:$0xff]
    %v380 = vld [vmem:[#allocation11 + $0x10] sm:$0xff]
    %v381 = vld [vmem:[#allocation11 + $0x18] sm:$0xff]
    %v382 = vld [vmem:[%s11] sm:$0x1]
    %v384 = vlaneseq
    %v385 = vshrl.u32 %v384, 7
    %v386 = vsub.s32 0, %v385
    %v387 = vrot.slane %v382, %v386
    %vm389 = vcmask 261120
    %v391 = vsel %vm389, %v377, 0
    %393 = vmatprep.subr.mxu0 0.0
    %394 = vmatpush1.msra.mxu0 0.0
    %395 = vmatprep.subr.mxu0 0.0
    %396 = vmatpush1.msra.mxu0 0.0
    %397 = vmatprep.subr.mxu0 0.0
    %398 = vmatpush1.msra.mxu0 0.0
    %399 = vmatprep.subr.mxu0 0.0
    %400 = vmatpush1.msra.mxu0 0.0
    %401 = vmatprep.subr.mxu0 0.0
    %402 = vmatpush1.msra.mxu0 0.0
    %403 = vmatprep.subr.mxu0 0.0
    %404 = vmatpush1.msra.mxu0 0.0
    %405 = vmatprep.subr.mxu0 0.0
    %406 = vmatpush1.msra.mxu0 0.0
    %407 = vmatprep.subr.mxu0 0.0
    %408 = vmatpush1.msra.mxu0 0.0
    %409 = vmatprep.subr.mxu0 0.0
    %410 = vmatpush1.msra.mxu0 0.0
    %411 = vmatprep.subr.mxu0 0.0
    %412 = vmatpush1.msra.mxu0 0.0
    %413 = vmatprep.subr.mxu0 0.0
    %414 = vmatpush1.msra.mxu0 0.0
    %415 = vmatprep.subr.mxu0 0.0
    %416 = vmatpush1.msra.mxu0 0.0
    %417 = vmatprep.subr.mxu0 0.0
    %418 = vmatpush1.msra.mxu0 %v381
    %419 = vmatprep.subr.mxu0 0.0
    %420 = vmatpush1.msra.mxu0 %v380
    %421 = vmatprep.subr.mxu0 0.0
    %422 = vmatpush1.msra.mxu0 %v379
    %423 = vmatprep.subr.mxu0 0.0
    %424 = vmatpush1.msra.mxu0 %v378
    %425 = vmatprep.subr.mxu0 0.0
    %426 = vmatpush2.msra.mxu0 0.0
    %427 = vmatprep.subr.mxu0 0.0
    %428 = vmatpush2.msra.mxu0 0.0
    %429 = vmatprep.subr.mxu0 0.0
    %430 = vmatpush2.msra.mxu0 0.0
    %431 = vmatprep.subr.mxu0 0.0
    %432 = vmatpush2.msra.mxu0 0.0
    %433 = vmatprep.subr.mxu0 0.0
    %434 = vmatpush2.msra.mxu0 0.0
    %435 = vmatprep.subr.mxu0 0.0
    %436 = vmatpush2.msra.mxu0 0.0
    %437 = vmatprep.subr.mxu0 0.0
    %438 = vmatpush2.msra.mxu0 0.0
    %439 = vmatprep.subr.mxu0 0.0
    %440 = vmatpush2.msra.mxu0 0.0
    %441 = vmatprep.subr.mxu0 0.0
    %442 = vmatpush2.msra.mxu0 0.0
    %443 = vmatprep.subr.mxu0 0.0
    %444 = vmatpush2.msra.mxu0 0.0
    %445 = vmatprep.subr.mxu0 0.0
    %446 = vmatpush2.msra.mxu0 0.0
    %447 = vmatprep.subr.mxu0 0.0
    %448 = vmatpush2.msra.mxu0 0.0
    %449 = vmatprep.subr.mxu0 0.0
    %450 = vmatpush2.msra.mxu0 0.0
    %451 = vmatprep.subr.mxu0 0.0
    %452 = vmatpush2.msra.mxu0 0.0
    %453 = vmatprep.subr.mxu0 0.0
    %454 = vmatpush2.msra.mxu0 0.0
    %455 = vmatprep.subr.mxu0 0.0
    %456 = vmatpush2.msra.mxu0 0.0
    %457 = vmatprep.mubr.f32.mxu0 0.0
    %458 = vmatmul.mubr.f32.gmra.mxu0 %v391
    %v459 = vpop.f32.mrf.mxu0
    %v460 = vadd.f32 %v387, %v459
    %v461 = vpop.f32.mrf.mxu0
    %462 = vdwg.mxu0
    %v463 = vld [vmem:[#allocation12] sm:$0xff]
    %v464 = vld [vmem:[#allocation12 + $0x8] sm:$0xff]
    %v465 = vld [vmem:[#allocation12 + $0x10] sm:$0xff]
    %v466 = vld [vmem:[#allocation12 + $0x18] sm:$0xff]
    %v467 = vld [vmem:[%s8] sm:$0xff]
    %468 = vmatprep.subr.mxu0 0.0
    %469 = vmatpush1.msra.mxu0 0.0
    %470 = vmatprep.subr.mxu0 0.0
    %471 = vmatpush1.msra.mxu0 0.0
    %472 = vmatprep.subr.mxu0 0.0
    %473 = vmatpush1.msra.mxu0 0.0
    %474 = vmatprep.subr.mxu0 0.0
    %475 = vmatpush1.msra.mxu0 0.0
    %476 = vmatprep.subr.mxu0 0.0
    %477 = vmatpush1.msra.mxu0 0.0
    %478 = vmatprep.subr.mxu0 0.0
    %479 = vmatpush1.msra.mxu0 0.0
    %480 = vmatprep.subr.mxu0 0.0
    %481 = vmatpush1.msra.mxu0 0.0
    %482 = vmatprep.subr.mxu0 0.0
    %483 = vmatpush1.msra.mxu0 0.0
    %484 = vmatprep.subr.mxu0 0.0
    %485 = vmatpush1.msra.mxu0 0.0
    %486 = vmatprep.subr.mxu0 0.0
    %487 = vmatpush1.msra.mxu0 0.0
    %488 = vmatprep.subr.mxu0 0.0
    %489 = vmatpush1.msra.mxu0 0.0
    %490 = vmatprep.subr.mxu0 0.0
    %491 = vmatpush1.msra.mxu0 0.0
    %492 = vmatprep.subr.mxu0 0.0
    %493 = vmatpush1.msra.mxu0 0.0
    %494 = vmatprep.subr.mxu0 0.0
    %495 = vmatpush1.msra.mxu0 0.0
    %496 = vmatprep.subr.mxu0 0.0
    %497 = vmatpush1.msra.mxu0 0.0
    %498 = vmatprep.subr.mxu0 0.0
    %499 = vmatpush1.msra.mxu0 %v467
    %500 = vmatprep.subr.mxu0 0.0
    %501 = vmatpush2.msra.mxu0 0.0
    %502 = vmatprep.subr.mxu0 0.0
    %503 = vmatpush2.msra.mxu0 0.0
    %504 = vmatprep.subr.mxu0 0.0
    %505 = vmatpush2.msra.mxu0 0.0
    %506 = vmatprep.subr.mxu0 0.0
    %507 = vmatpush2.msra.mxu0 0.0
    %508 = vmatprep.subr.mxu0 0.0
    %509 = vmatpush2.msra.mxu0 0.0
    %510 = vmatprep.subr.mxu0 0.0
    %511 = vmatpush2.msra.mxu0 0.0
    %512 = vmatprep.subr.mxu0 0.0
    %513 = vmatpush2.msra.mxu0 0.0
    %514 = vmatprep.subr.mxu0 0.0
    %515 = vmatpush2.msra.mxu0 0.0
    %516 = vmatprep.subr.mxu0 0.0
    %517 = vmatpush2.msra.mxu0 0.0
    %518 = vmatprep.subr.mxu0 0.0
    %519 = vmatpush2.msra.mxu0 0.0
    %520 = vmatprep.subr.mxu0 0.0
    %521 = vmatpush2.msra.mxu0 0.0
    %522 = vmatprep.subr.mxu0 0.0
    %523 = vmatpush2.msra.mxu0 0.0
    %524 = vmatprep.subr.mxu0 0.0
    %525 = vmatpush2.msra.mxu0 0.0
    %526 = vmatprep.subr.mxu0 0.0
    %527 = vmatpush2.msra.mxu0 0.0
    %528 = vmatprep.subr.mxu0 0.0
    %529 = vmatpush2.msra.mxu0 0.0
    %530 = vmatprep.subr.mxu0 0.0
    %531 = vmatpush2.msra.mxu0 0.0
    %532 = vmatprep.mubr.f32.mxu0 0.0
    %533 = vmatmul.mubr.f32.gmra.mxu0 %v296
    %v534 = vpop.f32.mrf.mxu0
    %v535 = vadd.f32 0.0, %v534
    %v536 = vpop.f32.mrf.mxu0
    %537 = vdwg.mxu0
    %v539 = vsel %vm389, %v460, 0
    %541 = vmatprep.subr.mxu0 0.0
    %542 = vmatpush1.msra.mxu0 0.0
    %543 = vmatprep.subr.mxu0 0.0
    %544 = vmatpush1.msra.mxu0 0.0
    %545 = vmatprep.subr.mxu0 0.0
    %546 = vmatpush1.msra.mxu0 0.0
    %547 = vmatprep.subr.mxu0 0.0
    %548 = vmatpush1.msra.mxu0 0.0
    %549 = vmatprep.subr.mxu0 0.0
    %550 = vmatpush1.msra.mxu0 0.0
    %551 = vmatprep.subr.mxu0 0.0
    %552 = vmatpush1.msra.mxu0 0.0
    %553 = vmatprep.subr.mxu0 0.0
    %554 = vmatpush1.msra.mxu0 0.0
    %555 = vmatprep.subr.mxu0 0.0
    %556 = vmatpush1.msra.mxu0 0.0
    %557 = vmatprep.subr.mxu0 0.0
    %558 = vmatpush1.msra.mxu0 0.0
    %559 = vmatprep.subr.mxu0 0.0
    %560 = vmatpush1.msra.mxu0 0.0
    %561 = vmatprep.subr.mxu0 0.0
    %562 = vmatpush1.msra.mxu0 0.0
    %563 = vmatprep.subr.mxu0 0.0
    %564 = vmatpush1.msra.mxu0 0.0
    %565 = vmatprep.subr.mxu0 0.0
    %566 = vmatpush1.msra.mxu0 %v466
    %567 = vmatprep.subr.mxu0 0.0
    %568 = vmatpush1.msra.mxu0 %v465
    %569 = vmatprep.subr.mxu0 0.0
    %570 = vmatpush1.msra.mxu0 %v464
    %571 = vmatprep.subr.mxu0 0.0
    %572 = vmatpush1.msra.mxu0 %v463
    %573 = vmatprep.subr.mxu0 0.0
    %574 = vmatpush2.msra.mxu0 0.0
    %575 = vmatprep.subr.mxu0 0.0
    %576 = vmatpush2.msra.mxu0 0.0
    %577 = vmatprep.subr.mxu0 0.0
    %578 = vmatpush2.msra.mxu0 0.0
    %579 = vmatprep.subr.mxu0 0.0
    %580 = vmatpush2.msra.mxu0 0.0
    %581 = vmatprep.subr.mxu0 0.0
    %582 = vmatpush2.msra.mxu0 0.0
    %583 = vmatprep.subr.mxu0 0.0
    %584 = vmatpush2.msra.mxu0 0.0
    %585 = vmatprep.subr.mxu0 0.0
    %586 = vmatpush2.msra.mxu0 0.0
    %587 = vmatprep.subr.mxu0 0.0
    %588 = vmatpush2.msra.mxu0 0.0
    %589 = vmatprep.subr.mxu0 0.0
    %590 = vmatpush2.msra.mxu0 0.0
    %591 = vmatprep.subr.mxu0 0.0
    %592 = vmatpush2.msra.mxu0 0.0
    %593 = vmatprep.subr.mxu0 0.0
    %594 = vmatpush2.msra.mxu0 0.0
    %595 = vmatprep.subr.mxu0 0.0
    %596 = vmatpush2.msra.mxu0 0.0
    %597 = vmatprep.subr.mxu0 0.0
    %598 = vmatpush2.msra.mxu0 0.0
    %599 = vmatprep.subr.mxu0 0.0
    %600 = vmatpush2.msra.mxu0 0.0
    %601 = vmatprep.subr.mxu0 0.0
    %602 = vmatpush2.msra.mxu0 0.0
    %603 = vmatprep.subr.mxu0 0.0
    %604 = vmatpush2.msra.mxu0 0.0
    %605 = vmatprep.mubr.f32.mxu0 0.0
    %606 = vmatmul.mubr.f32.gmra.mxu0 %v539
    %v607 = vpop.f32.mrf.mxu0
    %v608 = vadd.f32 %v535, %v607
    %v609 = vpop.f32.mrf.mxu0
    %610 = vdwg.mxu0
    %v611 = vld [vmem:[%s12] sm:$0x1]
    %v613 = vlaneseq
    %v614 = vshrl.u32 %v613, 7
    %v615 = vsub.s32 0, %v614
    %v616 = vrot.slane %v611, %v615
    %v618 = vadd.f32 %v608, %v616
    %v619 = vmax.f32 %v618, 0.0
    %v620 = vld [vmem:[#allocation14] sm:$0xff]
    %v622 = vsel %vm389, %v620, 0
    %v625 = vsel %vm389, %v619, 0
    %627 = vmatprep.subr.mxu0 0.0
    %628 = vmatpush1.xpose.msra.mxu0 0.0
    %629 = vmatprep.subr.mxu0 0.0
    %630 = vmatpush1.xpose.msra.mxu0 0.0
    %631 = vmatprep.subr.mxu0 0.0
    %632 = vmatpush1.xpose.msra.mxu0 0.0
    %633 = vmatprep.subr.mxu0 0.0
    %634 = vmatpush1.xpose.msra.mxu0 0.0
    %635 = vmatprep.subr.mxu0 0.0
    %636 = vmatpush1.xpose.msra.mxu0 0.0
    %637 = vmatprep.subr.mxu0 0.0
    %638 = vmatpush1.xpose.msra.mxu0 0.0
    %639 = vmatprep.subr.mxu0 0.0
    %640 = vmatpush1.xpose.msra.mxu0 0.0
    %641 = vmatprep.subr.mxu0 0.0
    %642 = vmatpush1.xpose.msra.mxu0 0.0
    %643 = vmatprep.subr.mxu0 0.0
    %644 = vmatpush1.xpose.msra.mxu0 0.0
    %645 = vmatprep.subr.mxu0 0.0
    %646 = vmatpush1.xpose.msra.mxu0 0.0
    %647 = vmatprep.subr.mxu0 0.0
    %648 = vmatpush1.xpose.msra.mxu0 0.0
    %649 = vmatprep.subr.mxu0 0.0
    %650 = vmatpush1.xpose.msra.mxu0 0.0
    %651 = vmatprep.subr.mxu0 0.0
    %652 = vmatpush1.xpose.msra.mxu0 0.0
    %653 = vmatprep.subr.mxu0 0.0
    %654 = vmatpush1.xpose.msra.mxu0 0.0
    %655 = vmatprep.subr.mxu0 0.0
    %656 = vmatpush1.xpose.msra.mxu0 0.0
    %657 = vmatprep.subr.mxu0 0.0
    %658 = vmatpush1.xpose.msra.mxu0 %v625
    %659 = vmatprep.subr.mxu0 0.0
    %660 = vmatpush2.xpose.msra.mxu0 0.0
    %661 = vmatprep.subr.mxu0 0.0
    %662 = vmatpush2.xpose.msra.mxu0 0.0
    %663 = vmatprep.subr.mxu0 0.0
    %664 = vmatpush2.xpose.msra.mxu0 0.0
    %665 = vmatprep.subr.mxu0 0.0
    %666 = vmatpush2.xpose.msra.mxu0 0.0
    %667 = vmatprep.subr.mxu0 0.0
    %668 = vmatpush2.xpose.msra.mxu0 0.0
    %669 = vmatprep.subr.mxu0 0.0
    %670 = vmatpush2.xpose.msra.mxu0 0.0
    %671 = vmatprep.subr.mxu0 0.0
    %672 = vmatpush2.xpose.msra.mxu0 0.0
    %673 = vmatprep.subr.mxu0 0.0
    %674 = vmatpush2.xpose.msra.mxu0 0.0
    %675 = vmatprep.subr.mxu0 0.0
    %676 = vmatpush2.xpose.msra.mxu0 0.0
    %677 = vmatprep.subr.mxu0 0.0
    %678 = vmatpush2.xpose.msra.mxu0 0.0
    %679 = vmatprep.subr.mxu0 0.0
    %680 = vmatpush2.xpose.msra.mxu0 0.0
    %681 = vmatprep.subr.mxu0 0.0
    %682 = vmatpush2.xpose.msra.mxu0 0.0
    %683 = vmatprep.subr.mxu0 0.0
    %684 = vmatpush2.xpose.msra.mxu0 0.0
    %685 = vmatprep.subr.mxu0 0.0
    %686 = vmatpush2.xpose.msra.mxu0 0.0
    %687 = vmatprep.subr.mxu0 0.0
    %688 = vmatpush2.xpose.msra.mxu0 0.0
    %689 = vmatprep.subr.mxu0 0.0
    %690 = vmatpush2.xpose.msra.mxu0 0.0
    %691 = vmatprep.mubr.f32.mxu0 0.0
    %692 = vmatmul.mubr.f32.gmra.mxu0 %v622
    %v693 = vpop.f32.mrf.mxu0
    %v694 = vadd.f32 0.0, %v693
    %v695 = vpop.f32.mrf.mxu0
    %696 = vdwg.mxu0
    %v697 = vld [vmem:[#allocation2] sm:$0x1]
    %699 = vset.pattern.permute.xlu0 0
    %700 = vperm.xlu0 %699, %v697
    %v701 = vpop.permute.xlu0 %700
    %v703 = vlaneseq
    %v704 = vshrl.u32 %v703, 7
    %v705 = vsub.s32 0, %v704
    %v706 = vrot.slane %v701, %v705
    %v707 = vadd.f32 %v694, %v706
    %vm708 = vcmask 57344
    %709 = vst.msk [vmem:[#allocation15] sm:$0x1] %vm708, %v707
    // Predicated region
    $region86: #{tpu_custom_call.1} parent=1 // pred_check
      _
    $region87: #{tpu_custom_call.1} parent=1 // pred_check_branch
      %711 = sbr.rel (0) target = $region89
    $region88: #{tpu_custom_call.1} parent=1 // pred_region
      %s713 = ssub.s32 16, 16
      %714 = vsyncadd [#allocation5], %s713
      %s716 = sshll.u32 [#allocation15], 4
      %s717 = int_to_ptr.vmem [resolvable:$true] %s716
      %719 = dma.vmem_to_hbm [thread:$0]  %s717, 16, %s14, [#allocation5]
    $region89: #{tpu_custom_call.1} parent=1 // pred_fallthru
      _
    // Predicated region
    $region90: #{tpu_custom_call.1} parent=1 // pred_check
      _
    $region91: #{tpu_custom_call.1} parent=1 // pred_check_branch
      %721 = sbr.rel (0) target = $region93
    $region92: #{tpu_custom_call.1} parent=1 // pred_region
      %722 = dma.done [#allocation5], 16
    $region93: #{tpu_custom_call.1} parent=1 // pred_fallthru
      _
    %723 = vsyncpa [#allocation4], 1
    %724 = vsyncpa [#allocation7], 1
    %725 = vsyncpa [#allocation10], 1
    %726 = vsyncpa [#allocation13], 1
    %727 = vsyncpa [#allocation5], 1

</llo_original>
